<compile_context>
chip_gen: v5e
topology: v5e:2x2
jax: 0.10.0
libtpu: 0.0.40
codegen_flags: <defaults>
</compile_context>

<pallas_src>
from typing import NamedTuple, Optional

import jax
import jax.numpy as jnp
from jax.experimental import pallas as pl
from jax.experimental.pallas import tpu as pltpu


def _round_up(x, m):
    return (x + m - 1) // m * m


def _fused_linear_kernel(x_ref, w_ref, b_ref, out_ref):
    # One row-tile: (TILE_N, K_pad) @ (K_pad, OUT_pad) on the MXU, f32 accumulate,
    # single lane-dense store.
    acc = jnp.dot(x_ref[...], w_ref[...], preferred_element_type=jnp.float32)
    out_ref[...] = (acc + b_ref[...]).astype(out_ref.dtype)


class PredictorParams(NamedTuple):
    w_fused: jax.Array     # (k_pad, out_pad), compute dtype (bf16 by default)
    b_fused: jax.Array     # (1, out_pad), f32
    num_classes: int
    in_channels: int
    cls_pad: int           # 128-aligned width of the cls block inside the fused output


def prepare_predictor_params(w_cls, b_cls, w_bbox, b_bbox,
                             *, compute_dtype=jnp.bfloat16) -> PredictorParams:
    """One-time parameter preparation (NOT in the per-call hot path).

    Pads the cls block and the bbox block to lane multiples SEPARATELY, fuses
    them along the output axis, zero-pads K to a multiple of 128 and transposes
    to (in, out) so the kernel sees a lane-dense weight slab and produces a
    lane-dense output slab whose cls/bbox slices both start 128-aligned.
    """
    num_classes, in_channels = w_cls.shape
    assert w_bbox.shape == (num_classes * 4, in_channels)

    cls_pad = _round_up(num_classes, 128)
    bbox_pad = _round_up(num_classes * 4, 128)
    out_pad = cls_pad + bbox_pad
    k_pad = _round_up(in_channels, 128)

    if compute_dtype is not None:
        w_cls = w_cls.astype(compute_dtype)
        w_bbox = w_bbox.astype(compute_dtype)

    w_cls_p = jnp.pad(w_cls, ((0, cls_pad - num_classes), (0, 0)))
    w_bbox_p = jnp.pad(w_bbox, ((0, bbox_pad - num_classes * 4), (0, 0)))
    w_fused = jnp.concatenate([w_cls_p, w_bbox_p], axis=0)          # (out_pad, in)
    w_fused = jnp.pad(w_fused, ((0, 0), (0, k_pad - in_channels)))  # (out_pad, k_pad)
    w_fused = w_fused.T                                             # (k_pad, out_pad)

    b_cls_p = jnp.pad(b_cls.astype(jnp.float32), (0, cls_pad - num_classes))
    b_bbox_p = jnp.pad(b_bbox.astype(jnp.float32), (0, bbox_pad - num_classes * 4))
    b_fused = jnp.concatenate([b_cls_p, b_bbox_p]).reshape(1, out_pad)

    return PredictorParams(w_fused, b_fused, num_classes, in_channels, cls_pad)


def fast_rcnn_predictor(x, params: PredictorParams, *,
                        tile_n=1024, compute_dtype=jnp.bfloat16,
                        out_dtype: Optional[jnp.dtype] = None):
    """x: (N, C, ...) -> flatten(start_dim=1) -> (N, in_channels).

    Returns (scores (N, num_classes), bbox_deltas (N, num_classes * 4)).
    """
    n = x.shape[0]
    x2d = x.reshape(n, -1)
    assert x2d.shape[1] == params.in_channels

    if out_dtype is None:
        out_dtype = x2d.dtype
    if compute_dtype is not None:
        x2d = x2d.astype(compute_dtype)
    # Dtype consistency with the prepared weights (avoids silent mixed-precision
    # promotion that would keep an f32 weight slab resident in VMEM).
    assert x2d.dtype == params.w_fused.dtype, (
        f"x compute dtype {x2d.dtype} != prepared weight dtype {params.w_fused.dtype}; "
        "pass the same compute_dtype to prepare_predictor_params and fast_rcnn_predictor")

    k_pad, out_pad = params.w_fused.shape
    num_classes = params.num_classes
    cls_pad = params.cls_pad

    # K zero-pad is mandatory for correctness only when in_channels % 128 != 0
    # (garbage in K would corrupt valid rows).  The typical 1024-d head output
    # skips this entirely -> no extra HBM pass over x.
    if params.in_channels != k_pad:
        x2d = jnp.pad(x2d, ((0, 0), (0, k_pad - params.in_channels)))

    # Row tile: sublane-aligned; clamp so the "parallel" grid keeps >= 2 tiles
    # (shards across v7x's 2 TensorCores; harmless single-TC on v5e/v6e).
    sub = 16 if x2d.dtype == jnp.bfloat16 else 8
    tn_cap = _round_up(pl.cdiv(n, 2), sub)
    tn = max(sub, min(_round_up(tile_n, sub), tn_cap))
    grid = pl.cdiv(n, tn)   # ragged last tile: garbage rows clipped at write

    compute_isize = jnp.dtype(x2d.dtype).itemsize
    out_isize = jnp.dtype(out_dtype).itemsize

    # Double-buffered x/out tiles + (double-buffered, constant-index) weight/bias.
    vmem_bytes = (2 * tn * (k_pad * compute_isize + out_pad * out_isize)
                  + 2 * (k_pad * out_pad * compute_isize + out_pad * 4))
    vmem_limit = int(min(max(32 * 1024 * 1024, (vmem_bytes * 3) // 2),
                         64 * 1024 * 1024))  # 64 MiB cap: safe on v7x physical VMEM

    cost = pl.CostEstimate(
        flops=2 * n * k_pad * out_pad,
        transcendentals=0,
        bytes_accessed=(x2d.size * compute_isize
                        + params.w_fused.size * compute_isize
                        + params.b_fused.size * 4
                        + n * out_pad * out_isize),
    )

    fused_out = pl.pallas_call(
        _fused_linear_kernel,
        out_shape=jax.ShapeDtypeStruct((n, out_pad), out_dtype),
        grid_spec=pltpu.PrefetchScalarGridSpec(
            num_scalar_prefetch=0,
            grid=(grid,),
            in_specs=[
                pl.BlockSpec((tn, k_pad), lambda i: (i, 0)),        # x row tiles (pipelined)
                pl.BlockSpec((k_pad, out_pad), lambda i: (0, 0)),   # weight, VMEM-resident
                pl.BlockSpec((1, out_pad), lambda i: (0, 0)),       # bias, VMEM-resident
            ],
            out_specs=pl.BlockSpec((tn, out_pad), lambda i: (i, 0)),
        ),
        compiler_params=pltpu.CompilerParams(
            dimension_semantics=("parallel",),
            vmem_limit_bytes=vmem_limit,
        ),
        cost_estimate=cost,
    )(x2d, params.w_fused, params.b_fused)

    # Both slices start at 128-aligned columns (0 and cls_pad): cheap trailing-pad removal.
    scores = fused_out[:, :num_classes]
    bbox_deltas = fused_out[:, cls_pad:cls_pad + num_classes * 4]
    return scores, bbox_deltas


def init_params(key, in_channels, num_classes, dtype=jnp.float32):
    """Deterministic init mimicking nn.Linear default uniform(-1/sqrt(fan_in), 1/sqrt(fan_in))."""
    k1, k2, k3, k4 = jax.random.split(key, 4)
    bound = 1.0 / jnp.sqrt(jnp.float32(in_channels))
    w_cls = jax.random.uniform(k1, (num_classes, in_channels), dtype, -bound, bound)
    b_cls = jax.random.uniform(k2, (num_classes,), dtype, -bound, bound)
    w_bbox = jax.random.uniform(k3, (num_classes * 4, in_channels), dtype, -bound, bound)
    b_bbox = jax.random.uniform(k4, (num_classes * 4,), dtype, -bound, bound)
    return w_cls, b_cls, w_bbox, b_bbox


if __name__ == "__main__":
    key = jax.random.PRNGKey(0)
    k_x, k_p = jax.random.split(key)

    # Pooled ROI features (N, C, H, W) — flatten(start_dim=1) gives (N, C*H*W).
    batch, C, H, W = 4, 8, 2, 2
    in_channels = C * H * W
    num_classes = 5

    x = jax.random.normal(k_x, (batch, C, H, W), jnp.float32)
    w_cls, b_cls, w_bbox, b_bbox = init_params(k_p, in_channels, num_classes)

    # Reference (matches the PyTorch FastRCNNPredictor forward) in plain JAX.
    x2d = x.reshape(batch, -1)
    ref_scores = x2d @ w_cls.T + b_cls
    ref_bbox = x2d @ w_bbox.T + b_bbox

    # Default bf16-compute path (HBM/MXU optimized; f32 accumulation).
    params_bf16 = prepare_predictor_params(w_cls, b_cls, w_bbox, b_bbox)
    scores, bbox_deltas = fast_rcnn_predictor(x, params_bf16)
    jax.block_until_ready((scores, bbox_deltas))

    assert scores.shape == (batch, num_classes)
    assert bbox_deltas.shape == (batch, num_classes * 4)
    assert jnp.allclose(scores, ref_scores, atol=5e-2, rtol=5e-2)
    assert jnp.allclose(bbox_deltas, ref_bbox, atol=5e-2, rtol=5e-2)

    # Strict f32 path (bit-for-tolerance against the reference).
    params_f32 = prepare_predictor_params(w_cls, b_cls, w_bbox, b_bbox,
                                          compute_dtype=jnp.float32)
    scores32, bbox32 = fast_rcnn_predictor(x, params_f32, compute_dtype=jnp.float32)
    jax.block_until_ready((scores32, bbox32))
    assert jnp.allclose(scores32, ref_scores, atol=1e-5, rtol=1e-5)
    assert jnp.allclose(bbox32, ref_bbox, atol=1e-5, rtol=1e-5)

    print("KERNEL_OK")
</pallas_src>

<mosaic_0001>
module attributes {stable_mosaic.version = 11 : i64} {
  func.func @_fused_linear_kernel(%arg0: i32, %arg1: memref<16x128xbf16, #tpu.memory_space<vmem>>, %arg2: memref<128x256xbf16, #tpu.memory_space<vmem>>, %arg3: memref<1x256xf32, #tpu.memory_space<vmem>>, %arg4: memref<16x256xf32, #tpu.memory_space<vmem>>) attributes {dimension_semantics = [#tpu.dimension_semantics<parallel>], iteration_bounds = array<i64: 1>, scalar_prefetch = 0 : i64, scratch_operands = 0 : i64, tpu.core_type = #tpu.core_type<tc>, window_params = [{transform_indices = @transform_0, window_bounds = array<i64: 16, 128>}, {pipeline_mode = #tpu.pipeline_mode<synchronous>, transform_indices = @transform_1, window_bounds = array<i64: 128, 256>}, {pipeline_mode = #tpu.pipeline_mode<synchronous>, transform_indices = @transform_2, window_bounds = array<i64: 1, 256>}, {transform_indices = @transform_3, window_bounds = array<i64: 16, 256>}]} {
    %c0 = arith.constant 0 : index
    %c0_0 = arith.constant 0 : index
    %0 = vector.load %arg1[%c0, %c0_0] : memref<16x128xbf16, #tpu.memory_space<vmem>>, vector<16x128xbf16>
    %c0_1 = arith.constant 0 : index
    %c0_2 = arith.constant 0 : index
    %1 = vector.load %arg2[%c0_1, %c0_2] : memref<128x256xbf16, #tpu.memory_space<vmem>>, vector<128x256xbf16>
    %cst = arith.constant dense<0.000000e+00> : vector<16x256xf32>
    %2 = tpu.matmul %0, %1, %cst {dimension_numbers = #tpu.dot_dimension_numbers<[1], [0], [0], [1], [0, 0, 1, 1], [], []>} : vector<16x128xbf16>, vector<128x256xbf16>, vector<16x256xf32> -> vector<16x256xf32>
    %c0_3 = arith.constant 0 : index
    %c0_4 = arith.constant 0 : index
    %3 = vector.load %arg3[%c0_3, %c0_4] : memref<1x256xf32, #tpu.memory_space<vmem>>, vector<1x256xf32>
    %4 = vector.broadcast %3 : vector<1x256xf32> to vector<16x256xf32>
    %5 = arith.addf %2, %4 : vector<16x256xf32>
    %c0_5 = arith.constant 0 : index
    %c0_6 = arith.constant 0 : index
    %6 = vector.load %arg4[%c0_5, %c0_6] : memref<16x256xf32, #tpu.memory_space<vmem>>, vector<16x256xf32>
    tpu.vector_store %arg4[%c0_5, %c0_6], %5 {strides = array<i32>} : memref<16x256xf32, #tpu.memory_space<vmem>>, vector<16x256xf32>,
    return
  }
  func.func @transform_0(%arg0: i32) -> (i32, i32) {
    %c0_i32 = arith.constant 0 : i32
    %c0_i32_0 = arith.constant 0 : i32
    return %arg0, %c0_i32 : i32, i32
  }
  func.func @transform_1(%arg0: i32) -> (i32, i32) {
    %c0_i32 = arith.constant 0 : i32
    %c0_i32_0 = arith.constant 0 : i32
    %c0_i32_1 = arith.constant 0 : i32
    return %c0_i32, %c0_i32_0 : i32, i32
  }
  func.func @transform_2(%arg0: i32) -> (i32, i32) {
    %c0_i32 = arith.constant 0 : i32
    %c0_i32_0 = arith.constant 0 : i32
    %c0_i32_1 = arith.constant 0 : i32
    return %c0_i32, %c0_i32_0 : i32, i32
  }
  func.func @transform_3(%arg0: i32) -> (i32, i32) {
    %c0_i32 = arith.constant 0 : i32
    %c0_i32_0 = arith.constant 0 : i32
    return %arg0, %c0_i32 : i32, i32
  }
}

</mosaic_0001>

<llo_original>
// kernel: tpu_custom_call.1
$region0: #{tpu_custom_call.1}
  #allocation0 [shape = 'u32[]', space=smem, size = 0x4, offset = 0x4, fixed_abs, tag = 'smem constant byte address 0x4 - core index']
  #allocation1 [shape = 'u32[72,128]{1,0:T(1,128)}', space=vmem, size = 0x9000, scoped, tag = 'internal scratch']
  %s0 = inlined_call_operand.hbm [shape: bf16[4,128], index: 0, kind: input, shape index: {}]
  %s1 = inlined_call_operand.hbm [shape: bf16[128,256], index: 1, kind: input, shape index: {}]
  %s2 = inlined_call_operand.hbm [shape: f32[1,256], index: 2, kind: input, shape index: {}]
  %s3 = inlined_call_operand.hbm [shape: f32[4,256], index: 3, kind: output, shape index: {}]
  %s4 = sld [smem:[#allocation0]]
  $region34: #{tpu_custom_call.1} parent=0
    _
  %s6 = ssub.s32 1, %s4
  %s7 = scalar_select 0, %s6, %s4
  $region1: #{tpu_custom_call.1} parent=0
    #allocation2 [shape = 'u8[4096]{0}', space=vmem, size = 0x1000, scoped, tag = 'input window, operand 0, single buffered']
    #allocation3 [shape = 's32[1]{0}', space=sflag, size = 0x4, scoped, tag = 'scoped memory for tpu_custom_call.1']
    #allocation4 [shape = 's32[1]{0}', space=sflag, size = 0x4, scoped, tag = 'scoped memory for tpu_custom_call.1']
    #allocation5 [shape = 'u8[65536]{0}', space=vmem, size = 0x10000, scoped, tag = 'input window, operand 1, single buffered']
    #allocation6 [shape = 's32[1]{0}', space=sflag, size = 0x4, scoped, tag = 'scoped memory for tpu_custom_call.1']
    #allocation7 [shape = 'u8[1024]{0}', space=vmem, size = 0x400, scoped, tag = 'input window, operand 2, single buffered']
    #allocation8 [shape = 'u8[16384]{0}', space=vmem, size = 0x4000, scoped, tag = 'output window, operand 0, single buffered']
    %8 = vsyncpa [#allocation3], 0
    %9 = vsyncpa [#allocation6], 0
    %10 = vsyncpa [#allocation4], 0
    // Predicated region
    $region2: #{tpu_custom_call.1} parent=1 // pred_check
      _
    $region3: #{tpu_custom_call.1} parent=1 // pred_check_branch
      %12 = sbr.rel (0) target = $region5
    $region4: #{tpu_custom_call.1} parent=1 // pred_region
      %14 = vsyncadd [#allocation3], 96
      %s15 = sshll.u32 %s0, 4
      %s16 = int_to_ptr.hbm [resolvable:$true] %s15
      %s17 = sshll.u32 [#allocation2], 4
      %s18 = int_to_ptr.vmem [resolvable:$true] %s17
      %23 = dma.hbm_to_vmem [thread:$0]  %s16, 32, %s18, [#allocation3], 32, 32, 2
    $region5: #{tpu_custom_call.1} parent=1 // pred_fallthru
      _
    // Predicated region
    $region6: #{tpu_custom_call.1} parent=1 // pred_check
      _
    $region7: #{tpu_custom_call.1} parent=1 // pred_check_branch
      %25 = sbr.rel (0) target = $region9
    $region8: #{tpu_custom_call.1} parent=1 // pred_region
      %27 = vsyncadd [#allocation6], 0
      %s28 = sshll.u32 %s1, 4
      %s29 = int_to_ptr.hbm [resolvable:$true] %s28
      %s30 = sshll.u32 [#allocation5], 4
      %s31 = int_to_ptr.vmem [resolvable:$true] %s30
      %36 = dma.hbm_to_vmem [thread:$0]  %s29, 2048, %s31, [#allocation6], 128, 128, 8
    $region9: #{tpu_custom_call.1} parent=1 // pred_fallthru
      _
    // Predicated region
    $region10: #{tpu_custom_call.1} parent=1 // pred_check
      _
    $region11: #{tpu_custom_call.1} parent=1 // pred_check_branch
      %38 = sbr.rel (0) target = $region13
    $region12: #{tpu_custom_call.1} parent=1 // pred_region
      %40 = vsyncadd [#allocation6], 0
      %s42 = sshll.u32 %s2, 4
      %s43 = int_to_ptr.hbm [resolvable:$true] %s42
      %s44 = sshll.u32 [#allocation7], 4
      %s45 = int_to_ptr.vmem [resolvable:$true] %s44
      %47 = dma.hbm_to_vmem [thread:$0]  %s43, 32, %s45, [#allocation6]
    $region13: #{tpu_custom_call.1} parent=1 // pred_fallthru
      _
    // Predicated region
    $region14: #{tpu_custom_call.1} parent=1 // pred_check
      _
    $region15: #{tpu_custom_call.1} parent=1 // pred_check_branch
      %49 = sbr.rel (0) target = $region17
    $region16: #{tpu_custom_call.1} parent=1 // pred_region
      %51 = dma.done [#allocation3], 128
    $region17: #{tpu_custom_call.1} parent=1 // pred_fallthru
      _
    // Predicated region
    $region18: #{tpu_custom_call.1} parent=1 // pred_check
      _
    $region19: #{tpu_custom_call.1} parent=1 // pred_check_branch
      %53 = sbr.rel (0) target = $region21
    $region20: #{tpu_custom_call.1} parent=1 // pred_region
      %55 = dma.done [#allocation6], 2048
    $region21: #{tpu_custom_call.1} parent=1 // pred_fallthru
      _
    // Predicated region
    $region22: #{tpu_custom_call.1} parent=1 // pred_check
      _
    $region23: #{tpu_custom_call.1} parent=1 // pred_check_branch
      %57 = sbr.rel (0) target = $region25
    $region24: #{tpu_custom_call.1} parent=1 // pred_region
      %59 = dma.done [#allocation6], 32
    $region25: #{tpu_custom_call.1} parent=1 // pred_fallthru
      _
    %v60 = vld [vmem:[#allocation2] sm:$0x3]
    %v61 = vld [vmem:[#allocation2 + $0x2] sm:$0x3]
    %v62 = vld [vmem:[#allocation2 + $0x4] sm:$0x3]
    %v63 = vld [vmem:[#allocation2 + $0x6] sm:$0x3]
    %v64 = vld [vmem:[#allocation5] sm:$0xff]
    %v65 = vld [vmem:[#allocation5 + $0x8] sm:$0xff]
    %v66 = vld [vmem:[#allocation5 + $0x10] sm:$0xff]
    %v67 = vld [vmem:[#allocation5 + $0x18] sm:$0xff]
    %v68 = vld [vmem:[#allocation5 + $0x20] sm:$0xff]
    %v69 = vld [vmem:[#allocation5 + $0x28] sm:$0xff]
    %v70 = vld [vmem:[#allocation5 + $0x30] sm:$0xff]
    %v71 = vld [vmem:[#allocation5 + $0x38] sm:$0xff]
    %v72 = vld [vmem:[#allocation5 + $0x40] sm:$0xff]
    %v73 = vld [vmem:[#allocation5 + $0x48] sm:$0xff]
    %v74 = vld [vmem:[#allocation5 + $0x50] sm:$0xff]
    %v75 = vld [vmem:[#allocation5 + $0x58] sm:$0xff]
    %v76 = vld [vmem:[#allocation5 + $0x60] sm:$0xff]
    %v77 = vld [vmem:[#allocation5 + $0x68] sm:$0xff]
    %v78 = vld [vmem:[#allocation5 + $0x70] sm:$0xff]
    %v79 = vld [vmem:[#allocation5 + $0x78] sm:$0xff]
    %v80 = vld [vmem:[#allocation7] sm:$0x3]
    %v82 = vperm.slane %v80, 0
    %v83 = vperm.slane %v80, 1
    %87 = vst [vmem:[#allocation1] ss:$4 sm:$0xff] %v60
    %s89 = scalar_lea.vmem [#allocation1], 1
    %90 = vst [vmem:[%s89] ss:$4 sm:$0xff] %v61
    %s92 = scalar_lea.vmem [#allocation1], 2
    %93 = vst [vmem:[%s92] ss:$4 sm:$0xff] %v62
    %s95 = scalar_lea.vmem [#allocation1], 3
    %96 = vst [vmem:[%s95] ss:$4 sm:$0xff] %v63
    %v97 = vld.sshfl [vmem:[#allocation1] sm:$0xff pattern:$0x73625140]
    %v115 = vunpack.c.l.b16 %v64
    %v116 = vunpack.c.h.b16 %v64
    %v117 = vunpack.c.l.b16 %v65
    %v118 = vunpack.c.h.b16 %v65
    %v119 = vunpack.c.l.b16 %v66
    %v120 = vunpack.c.h.b16 %v66
    %v121 = vunpack.c.l.b16 %v67
    %v122 = vunpack.c.h.b16 %v67
    %v123 = vunpack.c.l.b16 %v68
    %v124 = vunpack.c.h.b16 %v68
    %v125 = vunpack.c.l.b16 %v69
    %v126 = vunpack.c.h.b16 %v69
    %v127 = vunpack.c.l.b16 %v70
    %v128 = vunpack.c.h.b16 %v70
    %v129 = vunpack.c.l.b16 %v71
    %v130 = vunpack.c.h.b16 %v71
    %v131 = vunpack.c.l.b16 %v72
    %v132 = vunpack.c.h.b16 %v72
    %v133 = vunpack.c.l.b16 %v73
    %v134 = vunpack.c.h.b16 %v73
    %v135 = vunpack.c.l.b16 %v74
    %v136 = vunpack.c.h.b16 %v74
    %v137 = vunpack.c.l.b16 %v75
    %v138 = vunpack.c.h.b16 %v75
    %v139 = vunpack.c.l.b16 %v76
    %v140 = vunpack.c.h.b16 %v76
    %v141 = vunpack.c.l.b16 %v77
    %v142 = vunpack.c.h.b16 %v77
    %v143 = vunpack.c.l.b16 %v78
    %v144 = vunpack.c.h.b16 %v78
    %v145 = vunpack.c.l.b16 %v79
    %v146 = vunpack.c.h.b16 %v79
    %v147 = vpack.c.b16 %v117, %v115
    %v148 = vpack.c.b16 %v118, %v116
    %v149 = vpack.c.b16 %v121, %v119
    %v150 = vpack.c.b16 %v122, %v120
    %v151 = vpack.c.b16 %v125, %v123
    %v152 = vpack.c.b16 %v126, %v124
    %v153 = vpack.c.b16 %v129, %v127
    %v154 = vpack.c.b16 %v130, %v128
    %v155 = vpack.c.b16 %v133, %v131
    %v156 = vpack.c.b16 %v134, %v132
    %v157 = vpack.c.b16 %v137, %v135
    %v158 = vpack.c.b16 %v138, %v136
    %v159 = vpack.c.b16 %v141, %v139
    %v160 = vpack.c.b16 %v142, %v140
    %v161 = vpack.c.b16 %v145, %v143
    %v162 = vpack.c.b16 %v146, %v144
    %179 = vmatpush.bf16.msra.mxu0 %v161
    %180 = vmatpush.bf16.msra.mxu0 %v159
    %181 = vmatpush.bf16.msra.mxu0 %v157
    %182 = vmatpush.bf16.msra.mxu0 %v155
    %183 = vmatpush.bf16.msra.mxu0 %v153
    %184 = vmatpush.bf16.msra.mxu0 %v151
    %185 = vmatpush.bf16.msra.mxu0 %v149
    %186 = vmatpush.bf16.msra.mxu0 %v147
    %187 = vmatmul.bf16.gmra.mxu0 %v97
    %v188 = vpop.f32.mrf.mxu0
    %v189 = vadd.f32 %v82, %v188
    %v190 = vpop.f32.mrf.mxu0
    %v191 = vadd.f32 %v82, %v190
    %192 = vdwg.mxu0
    %193 = vmatpush.bf16.msra.mxu0 %v162
    %194 = vmatpush.bf16.msra.mxu0 %v160
    %195 = vmatpush.bf16.msra.mxu0 %v158
    %196 = vmatpush.bf16.msra.mxu0 %v156
    %197 = vmatpush.bf16.msra.mxu0 %v154
    %198 = vmatpush.bf16.msra.mxu0 %v152
    %199 = vmatpush.bf16.msra.mxu0 %v150
    %200 = vmatpush.bf16.msra.mxu0 %v148
    %201 = vmatmul.bf16.gmra.mxu0 %v97
    %v202 = vpop.f32.mrf.mxu0
    %v203 = vadd.f32 %v83, %v202
    %v204 = vpop.f32.mrf.mxu0
    %v205 = vadd.f32 %v83, %v204
    %206 = vdwg.mxu0
    %v211 = vrot.slane %v203, 4
    %v212 = vrot.slane %v205, 4
    %vm213 = vcmask 1043456
    %v214 = vsel %vm213, %v189, %v211
    %v215 = vsel %vm213, %v211, %v189
    %v216 = vrot.slane %v215, 4
    %v217 = vsel %vm213, %v191, %v212
    %v218 = vsel %vm213, %v212, %v191
    %v219 = vrot.slane %v218, 4
    %224 = vst [vmem:[#allocation8] sm:$0xff] %v214
    %225 = vst [vmem:[#allocation8 + $0x8] sm:$0xff] %v216
    %226 = vst [vmem:[#allocation8 + $0x10] sm:$0xff] %v217
    %227 = vst [vmem:[#allocation8 + $0x18] sm:$0xff] %v219
    // Predicated region
    $region26: #{tpu_custom_call.1} parent=1 // pred_check
      _
    $region27: #{tpu_custom_call.1} parent=1 // pred_check_branch
      %229 = sbr.rel (0) target = $region29
    $region28: #{tpu_custom_call.1} parent=1 // pred_region
      %231 = vsyncadd [#allocation4], 384
      %s232 = sshll.u32 [#allocation8], 4
      %s233 = int_to_ptr.vmem [resolvable:$true] %s232
      %s234 = sshll.u32 %s3, 4
      %s235 = int_to_ptr.hbm [resolvable:$true] %s234
      %240 = dma.vmem_to_hbm [thread:$0]  %s233, 128, %s235, [#allocation4], 128, 128, 8
    $region29: #{tpu_custom_call.1} parent=1 // pred_fallthru
      _
    // Predicated region
    $region30: #{tpu_custom_call.1} parent=1 // pred_check
      _
    $region31: #{tpu_custom_call.1} parent=1 // pred_check_branch
      %242 = sbr.rel (0) target = $region33
    $region32: #{tpu_custom_call.1} parent=1 // pred_region
      %244 = dma.done [#allocation4], 512
    $region33: #{tpu_custom_call.1} parent=1 // pred_fallthru
      _
    %245 = vsyncpa [#allocation3], 1
    %246 = vsyncpa [#allocation6], 1
    %247 = vsyncpa [#allocation4], 1

</llo_original>
